<compile_context>
chip_gen: v6e
topology: v6e:2x2x1
jax: 0.10.0
libtpu: 0.0.40
codegen_flags: <defaults>
</compile_context>

<pallas_src>
import functools

import jax
import jax.numpy as jnp
from jax.experimental import pallas as pl
from jax.experimental.pallas import tpu as pltpu

_LANE = 128
_DEFAULT_TM = 4096   # rows per grid step (f32: 2 MiB / input / pipeline buffer)
_ACC_ROWS = 64       # accumulator rows (8 vregs) -> 8 independent add chains


def _num_tensorcores():
    """2 on multi-TensorCore parts (v7x-class), 1 on v5e/v6e single-TC chips."""
    # Device-kind heuristic is deliberately conservative: only chips where the
    # CORE_PARALLEL grid axis is known to shard get the 2-core split; everyone
    # else runs the cheap single-core path.
    try:
        kind = jax.devices()[0].device_kind.lower()
    except Exception:
        return 1
    return 2 if "v7" in kind else 1


def _dice_kernel(x_ref, t_ref, o_ref, acc_i_ref, acc_s_ref, *, acc_rows):
    i = pl.program_id(1)  # reduction steps within this core

    @pl.when(i == 0)
    def _():
        acc_i_ref[...] = jnp.zeros_like(acc_i_ref)
        acc_s_ref[...] = jnp.zeros_like(acc_s_ref)

    x = x_ref[...].astype(jnp.float32)   # no-op for f32 inputs
    t = t_ref[...].astype(jnp.float32)

    if acc_rows > 1:
        # Fold (tm,128) -> (tm/acc_rows, acc_rows, 128) -> (acc_rows, 128):
        # acc_rows/8 vregs per accumulator => that many independent add chains,
        # keeping the reduce latency well under the HBM delivery rate.
        def fold(a):
            return jnp.sum(a.reshape(-1, acc_rows, _LANE), axis=0)
    else:
        # Tiny full-extent blocks whose row count is not a multiple of 8.
        def fold(a):
            return jnp.sum(a, axis=0, keepdims=True)

    acc_i_ref[...] += fold(x * t)            # intersection partials
    acc_s_ref[...] += fold(x) + fold(t)      # sum(x) + sum(t), no x+t temp

    @pl.when(i == pl.num_programs(1) - 1)
    def _():
        o_ref[0, 0] = jnp.sum(acc_i_ref[...])   # per-core intersection
        o_ref[0, 1] = jnp.sum(acc_s_ref[...])   # per-core sum(x) + sum(t)


def dice_loss(inputs, targets, smooth=1.0, *, tm_max=_DEFAULT_TM, ncores=None):
    """Pallas implementation of DiceLoss.forward (returns a scalar f32)."""
    x = inputs.reshape(-1)
    t = targets.reshape(-1)
    n = x.shape[0]
    smooth = jnp.float32(smooth)
    if n == 0:
        return jnp.float32(0.0)  # dice = smooth / smooth = 1

    # Only a <128-element lane tail ever needs padding (zeros contribute
    # nothing to either sum); the multiple-of-128 case is a free reshape.
    rem = n % _LANE
    if rem:
        x = jnp.pad(x, (0, _LANE - rem))
        t = jnp.pad(t, (0, _LANE - rem))
    rows = x.shape[0] // _LANE
    x2 = x.reshape(rows, _LANE)   # lane-dense, row-major, contiguous
    t2 = t.reshape(rows, _LANE)

    # Sublane multiple required by the native dtypes (f32: 8, bf16: 16, i8: 32).
    sub = max(8,
              32 // jnp.dtype(x2.dtype).itemsize,
              32 // jnp.dtype(t2.dtype).itemsize)

    if ncores is None:
        ncores = _num_tensorcores()

    if rows <= tm_max:
        tm = rows                       # full-extent block: always legal
        full = 1
    else:
        tm = (tm_max // sub) * sub
        assert tm >= sub, "tm_max too small for the input dtypes"
        full = rows // tm               # whole blocks (static Python int)

    if full < 2 or ncores < 2:
        ncores = 1                      # 1-TC chips / too little work to split
    spc = full // ncores                # grid steps per core (rectangular grid)
    rows_k = ncores * spc * tm          # rows covered by the kernel (no masking)

    acc_rows = _ACC_ROWS if tm % _ACC_ROWS == 0 else (8 if tm % 8 == 0 else 1)
    kernel = functools.partial(_dice_kernel, acc_rows=acc_rows)

    def in_map(c, i):
        return (c * spc + i, 0)         # always in-bounds: no clamp, no mask

    # VMEM budget: native-dtype double-buffered inputs + f32-expanded
    # intermediates at 4 B/elem (matters on v7x's 64 MiB VMEM) + slack.
    itm = x2.dtype.itemsize
    in_bytes = 2 * 2 * tm * _LANE * itm
    tmp_bytes = 3 * tm * _LANE * 4
    vmem_limit = max(16 << 20, int(in_bytes + tmp_bytes) + (4 << 20))

    # Real core sharding only where it exists; a size-1 axis otherwise.
    core_sem = pltpu.CORE_PARALLEL if ncores > 1 else pltpu.ARBITRARY

    partials = pl.pallas_call(
        kernel,
        out_shape=jax.ShapeDtypeStruct((ncores, 2), jnp.float32),
        grid_spec=pltpu.PrefetchScalarGridSpec(
            num_scalar_prefetch=0,
            grid=(ncores, spc),
            in_specs=[
                pl.BlockSpec((tm, _LANE), in_map),
                pl.BlockSpec((tm, _LANE), in_map),
            ],
            out_specs=pl.BlockSpec(
                (1, 2), lambda c, i: (c, 0),
                memory_space=pltpu.MemorySpace.SMEM),
            scratch_shapes=[
                pltpu.VMEM((acc_rows, _LANE), jnp.float32),
                pltpu.VMEM((acc_rows, _LANE), jnp.float32),
            ],
        ),
        compiler_params=pltpu.CompilerParams(
            dimension_semantics=(core_sem, pltpu.ARBITRARY),
            vmem_limit_bytes=vmem_limit,
        ),
    )(x2, t2)

    intersection = jnp.sum(partials[:, 0])
    total = jnp.sum(partials[:, 1])

    # Peeled tail (ragged rows + any per-core remainder block): tiny jnp
    # reduction, so the kernel steady-state never pays mask/clamp work.
    if rows_k < rows:
        xt = x2[rows_k:].astype(jnp.float32)
        tt = t2[rows_k:].astype(jnp.float32)
        intersection = intersection + jnp.sum(xt * tt)
        total = total + jnp.sum(xt) + jnp.sum(tt)

    dice = (2.0 * intersection + smooth) / (total + smooth)
    return 1.0 - dice


def _dice_ref(inputs, targets, smooth=1.0):
    x = inputs.reshape(-1).astype(jnp.float32)
    t = targets.reshape(-1).astype(jnp.float32)
    inter = jnp.sum(x * t)
    dice = (2.0 * inter + smooth) / (jnp.sum(x) + jnp.sum(t) + smooth)
    return 1.0 - dice


if __name__ == "__main__":
    key = jax.random.PRNGKey(0)
    k1, k2, k3, k4 = jax.random.split(key, 4)

    # Segmentation-style inputs: predicted probabilities + binary mask (NCHW).
    inputs = jax.nn.sigmoid(jax.random.normal(k1, (2, 4, 16, 16), jnp.float32))
    targets = (jax.random.uniform(k2, (2, 4, 16, 16)) > 0.5).astype(jnp.float32)
    loss = jax.block_until_ready(dice_loss(inputs, targets, smooth=1.0))
    ref = _dice_ref(inputs, targets, smooth=1.0)
    assert jnp.allclose(loss, ref, atol=1e-5, rtol=1e-5), (loss, ref)

    # Ragged-shape check: lane-tail padding, non-multiple-of-8 full-extent
    # block (default tm), and the peeled row-tail path (tm_max=8).
    xo = jax.nn.sigmoid(jax.random.normal(k3, (3, 5, 7, 11), jnp.float32))
    to = (jax.random.uniform(k4, (3, 5, 7, 11)) > 0.5).astype(jnp.float32)
    ref_o = _dice_ref(xo, to, smooth=1.0)
    for tmx in (_DEFAULT_TM, 8):
        loss_o = jax.block_until_ready(dice_loss(xo, to, smooth=1.0, tm_max=tmx))
        assert jnp.allclose(loss_o, ref_o, atol=1e-5, rtol=1e-5), (tmx, loss_o, ref_o)

    # Multi-step path: several grid steps (tm_max=32), grid steps + peeled
    # remainder rows (tm_max=48), and the 64-row multi-vreg accumulator path
    # (default tm, rows=128).
    xm = jax.nn.sigmoid(jax.random.normal(k1, (4, 4, 32, 32), jnp.float32))
    tmsk = (jax.random.uniform(k2, (4, 4, 32, 32)) > 0.5).astype(jnp.float32)
    ref_m = _dice_ref(xm, tmsk, smooth=1.0)
    for tmx in (32, 48, _DEFAULT_TM):
        loss_m = jax.block_until_ready(dice_loss(xm, tmsk, smooth=1.0, tm_max=tmx))
        assert jnp.allclose(loss_m, ref_m, atol=1e-5, rtol=1e-5), (tmx, loss_m, ref_m)

    print("KERNEL_OK")
</pallas_src>

<mosaic_0001>
module attributes {stable_mosaic.version = 11 : i64} {
  func.func @_dice_kernel(%arg0: i32, %arg1: i32, %arg2: memref<16x128xf32, #tpu.memory_space<vmem>>, %arg3: memref<16x128xf32, #tpu.memory_space<vmem>>, %arg4: memref<1x2xf32, #tpu.memory_space<smem>>, %arg5: memref<8x128xf32, #tpu.memory_space<vmem>>, %arg6: memref<8x128xf32, #tpu.memory_space<vmem>>) attributes {dimension_semantics = [#tpu.dimension_semantics<arbitrary>, #tpu.dimension_semantics<arbitrary>], iteration_bounds = array<i64: 1, 1>, scalar_prefetch = 0 : i64, scratch_operands = 2 : i64, tpu.core_type = #tpu.core_type<tc>, window_params = [{transform_indices = @transform_0, window_bounds = array<i64: 16, 128>}, {transform_indices = @transform_1, window_bounds = array<i64: 16, 128>}, {transform_indices = @transform_2, window_bounds = array<i64: 1, 2>}]} {
    %c0_i32 = arith.constant 0 : i32
    %0 = arith.cmpi eq, %arg1, %c0_i32 : i32
    %1 = arith.extui %0 : i1 to i32
    %c0_i32_0 = arith.constant 0 : i32
    %2 = arith.cmpi ne, %1, %c0_i32_0 : i32
    scf.if %2 {
      %cst_16 = arith.constant 0.000000e+00 : f32
      %22 = vector.broadcast %cst_16 : f32 to vector<8x128xf32>
      %c0_17 = arith.constant 0 : index
      %c0_18 = arith.constant 0 : index
      %23 = vector.load %arg5[%c0_17, %c0_18] : memref<8x128xf32, #tpu.memory_space<vmem>>, vector<8x128xf32>
      tpu.vector_store %arg5[%c0_17, %c0_18], %22 {strides = array<i32>} : memref<8x128xf32, #tpu.memory_space<vmem>>, vector<8x128xf32>,
      %cst_19 = arith.constant 0.000000e+00 : f32
      %24 = vector.broadcast %cst_19 : f32 to vector<8x128xf32>
      %c0_20 = arith.constant 0 : index
      %c0_21 = arith.constant 0 : index
      %25 = vector.load %arg6[%c0_20, %c0_21] : memref<8x128xf32, #tpu.memory_space<vmem>>, vector<8x128xf32>
      tpu.vector_store %arg6[%c0_20, %c0_21], %24 {strides = array<i32>} : memref<8x128xf32, #tpu.memory_space<vmem>>, vector<8x128xf32>,
    } else {
    }
    %c0 = arith.constant 0 : index
    %c0_1 = arith.constant 0 : index
    %3 = vector.load %arg2[%c0, %c0_1] : memref<16x128xf32, #tpu.memory_space<vmem>>, vector<16x128xf32>
    %c0_2 = arith.constant 0 : index
    %c0_3 = arith.constant 0 : index
    %4 = vector.load %arg3[%c0_2, %c0_3] : memref<16x128xf32, #tpu.memory_space<vmem>>, vector<16x128xf32>
    %c0_4 = arith.constant 0 : index
    %c0_5 = arith.constant 0 : index
    %5 = vector.load %arg5[%c0_4, %c0_5] : memref<8x128xf32, #tpu.memory_space<vmem>>, vector<8x128xf32>
    %6 = arith.mulf %3, %4 : vector<16x128xf32>
    %7 = vector.shape_cast %6 : vector<16x128xf32> to vector<2x8x128xf32>
    %cst = arith.constant dense<0.000000e+00> : vector<8x128xf32>
    %8 = vector.multi_reduction <add>, %7, %cst [0] : vector<2x8x128xf32> to vector<8x128xf32>
    %9 = arith.addf %5, %8 : vector<8x128xf32>
    %c0_6 = arith.constant 0 : index
    %c0_7 = arith.constant 0 : index
    %10 = vector.load %arg5[%c0_6, %c0_7] : memref<8x128xf32, #tpu.memory_space<vmem>>, vector<8x128xf32>
    tpu.vector_store %arg5[%c0_6, %c0_7], %9 {strides = array<i32>} : memref<8x128xf32, #tpu.memory_space<vmem>>, vector<8x128xf32>,
    %c0_8 = arith.constant 0 : index
    %c0_9 = arith.constant 0 : index
    %11 = vector.load %arg6[%c0_8, %c0_9] : memref<8x128xf32, #tpu.memory_space<vmem>>, vector<8x128xf32>
    %12 = vector.shape_cast %3 : vector<16x128xf32> to vector<2x8x128xf32>
    %cst_10 = arith.constant dense<0.000000e+00> : vector<8x128xf32>
    %13 = vector.multi_reduction <add>, %12, %cst_10 [0] : vector<2x8x128xf32> to vector<8x128xf32>
    %14 = vector.shape_cast %4 : vector<16x128xf32> to vector<2x8x128xf32>
    %cst_11 = arith.constant dense<0.000000e+00> : vector<8x128xf32>
    %15 = vector.multi_reduction <add>, %14, %cst_11 [0] : vector<2x8x128xf32> to vector<8x128xf32>
    %16 = arith.addf %13, %15 : vector<8x128xf32>
    %17 = arith.addf %11, %16 : vector<8x128xf32>
    %c0_12 = arith.constant 0 : index
    %c0_13 = arith.constant 0 : index
    %18 = vector.load %arg6[%c0_12, %c0_13] : memref<8x128xf32, #tpu.memory_space<vmem>>, vector<8x128xf32>
    tpu.vector_store %arg6[%c0_12, %c0_13], %17 {strides = array<i32>} : memref<8x128xf32, #tpu.memory_space<vmem>>, vector<8x128xf32>,
    %c0_i32_14 = arith.constant 0 : i32
    %19 = arith.cmpi eq, %arg1, %c0_i32_14 : i32
    %20 = arith.extui %19 : i1 to i32
    %c0_i32_15 = arith.constant 0 : i32
    %21 = arith.cmpi ne, %20, %c0_i32_15 : i32
    scf.if %21 {
      %c0_16 = arith.constant 0 : index
      %c0_17 = arith.constant 0 : index
      %22 = vector.load %arg5[%c0_16, %c0_17] : memref<8x128xf32, #tpu.memory_space<vmem>>, vector<8x128xf32>
      %23 = vector.shape_cast %22 : vector<8x128xf32> to vector<1x8x128xf32>
      %cst_18 = arith.constant dense<0.000000e+00> : vector<1xf32>
      %24 = vector.multi_reduction <add>, %23, %cst_18 [1, 2] : vector<1x8x128xf32> to vector<1xf32>
      %25 = vector.shape_cast %24 : vector<1xf32> to vector<1x1x1xf32>
      %26 = vector.extract %25[0, 0, 0] : f32 from vector<1x1x1xf32>
      %c0_19 = arith.constant 0 : index
      %c0_20 = arith.constant 0 : index
      %27 = memref.load %arg4[%c0_19, %c0_20] : memref<1x2xf32, #tpu.memory_space<smem>>
      memref.store %26, %arg4[%c0_19, %c0_20] : memref<1x2xf32, #tpu.memory_space<smem>>
      %c0_21 = arith.constant 0 : index
      %c0_22 = arith.constant 0 : index
      %28 = vector.load %arg6[%c0_21, %c0_22] : memref<8x128xf32, #tpu.memory_space<vmem>>, vector<8x128xf32>
      %29 = vector.shape_cast %28 : vector<8x128xf32> to vector<1x8x128xf32>
      %cst_23 = arith.constant dense<0.000000e+00> : vector<1xf32>
      %30 = vector.multi_reduction <add>, %29, %cst_23 [1, 2] : vector<1x8x128xf32> to vector<1xf32>
      %31 = vector.shape_cast %30 : vector<1xf32> to vector<1x1x1xf32>
      %32 = vector.extract %31[0, 0, 0] : f32 from vector<1x1x1xf32>
      %c0_24 = arith.constant 0 : index
      %c1 = arith.constant 1 : index
      %33 = memref.load %arg4[%c0_24, %c1] : memref<1x2xf32, #tpu.memory_space<smem>>
      memref.store %32, %arg4[%c0_24, %c1] : memref<1x2xf32, #tpu.memory_space<smem>>
    } else {
    }
    return
  }
  func.func @transform_0(%arg0: i32, %arg1: i32) -> (i32, i32) {
    %c1_i32 = arith.constant 1 : i32
    %0 = arith.muli %arg0, %c1_i32 : i32
    %1 = arith.addi %0, %arg1 : i32
    %c0_i32 = arith.constant 0 : i32
    %c0_i32_0 = arith.constant 0 : i32
    return %1, %c0_i32 : i32, i32
  }
  func.func @transform_1(%arg0: i32, %arg1: i32) -> (i32, i32) {
    %c1_i32 = arith.constant 1 : i32
    %0 = arith.muli %arg0, %c1_i32 : i32
    %1 = arith.addi %0, %arg1 : i32
    %c0_i32 = arith.constant 0 : i32
    %c0_i32_0 = arith.constant 0 : i32
    return %1, %c0_i32 : i32, i32
  }
  func.func @transform_2(%arg0: i32, %arg1: i32) -> (i32, i32) {
    %c0_i32 = arith.constant 0 : i32
    %c0_i32_0 = arith.constant 0 : i32
    return %arg0, %c0_i32 : i32, i32
  }
}

</mosaic_0001>

<llo_original>
// kernel: tpu_custom_call.1
$region0: #{tpu_custom_call.1}
  #allocation0 [shape = 'u32[]', space=smem, size = 0x4, offset = 0x4, fixed_abs, tag = 'smem constant byte address 0x4 - core index']
  #allocation1 [shape = 'u32[144,128]{1,0:T(1,128)}', space=vmem, size = 0x12000, scoped, tag = 'internal scratch']
  #allocation2 [shape = 'f32[8,128]{1,0:T(8,128)}', space=vmem, size = 0x1000, scoped, tag = 'scratch operand']
  #allocation3 [shape = 'f32[8,128]{1,0:T(8,128)}', space=vmem, size = 0x1000, scoped, tag = 'scratch operand']
  %s0 = inlined_call_operand.hbm [shape: f32[16,128], index: 0, kind: input, shape index: {}]
  %s1 = inlined_call_operand.hbm [shape: f32[16,128], index: 1, kind: input, shape index: {}]
  %s2 = inlined_call_operand.hbm [shape: f32[1,2], index: 2, kind: output, shape index: {}]
  %s3 = sld [smem:[#allocation0]]
  $region34: #{tpu_custom_call.1} parent=0
    _
  %s5 = ssub.s32 1, %s3
  %s6 = scalar_select 0, %s5, %s3
  $region1: #{tpu_custom_call.1} parent=0
    #allocation4 [shape = 'u8[8192]{0}', space=vmem, size = 0x2000, scoped, tag = 'input window, operand 0, single buffered']
    #allocation5 [shape = 's32[1]{0}', space=sflag, size = 0x4, scoped, tag = 'scoped memory for tpu_custom_call.1']
    #allocation6 [shape = 's32[1]{0}', space=sflag, size = 0x4, scoped, tag = 'scoped memory for tpu_custom_call.1']
    #allocation7 [shape = 'u8[8192]{0}', space=vmem, size = 0x2000, scoped, tag = 'input window, operand 1, single buffered']
    #allocation8 [shape = 's32[1]{0}', space=sflag, size = 0x4, scoped, tag = 'scoped memory for tpu_custom_call.1']
    #allocation9 [shape = 'u8[512]{0}', space=smem, size = 0x200, scoped, tag = 'output window, operand 0, single buffered']
    %7 = vsyncpa [#allocation5], 0
    %8 = vsyncpa [#allocation8], 0
    %9 = vsyncpa [#allocation6], 0
    // Predicated region
    $region2: #{tpu_custom_call.1} parent=1 // pred_check
      _
    $region3: #{tpu_custom_call.1} parent=1 // pred_check_branch
      %11 = sbr.rel (0) target = $region5
    $region4: #{tpu_custom_call.1} parent=1 // pred_region
      %s12 = sadd.s32 0, 0
      %s13 = smul.u32 2, %s12
      %s15 = ssub.s32 256, 256
      %16 = vsyncadd [#allocation5], %s15
      %s17 = smul.addr %s13, 128
      %s18 = scalar_lea.hbm %s0, %s17
      %s19 = sshll.u32 [#allocation4], 4
      %s20 = int_to_ptr.vmem [resolvable:$true] %s19
      %25 = dma.hbm_to_vmem [thread:$0]  %s18, 256, %s20, [#allocation5], 128, 128, 8
    $region5: #{tpu_custom_call.1} parent=1 // pred_fallthru
      _
    // Predicated region
    $region6: #{tpu_custom_call.1} parent=1 // pred_check
      _
    $region7: #{tpu_custom_call.1} parent=1 // pred_check_branch
      %27 = sbr.rel (0) target = $region9
    $region8: #{tpu_custom_call.1} parent=1 // pred_region
      %s28 = sadd.s32 0, 0
      %s29 = smul.u32 2, %s28
      %s31 = ssub.s32 256, 256
      %32 = vsyncadd [#allocation8], %s31
      %s33 = smul.addr %s29, 128
      %s34 = scalar_lea.hbm %s1, %s33
      %s35 = sshll.u32 [#allocation7], 4
      %s36 = int_to_ptr.vmem [resolvable:$true] %s35
      %41 = dma.hbm_to_vmem [thread:$0]  %s34, 256, %s36, [#allocation8], 128, 128, 8
    $region9: #{tpu_custom_call.1} parent=1 // pred_fallthru
      _
    // Predicated region
    $region10: #{tpu_custom_call.1} parent=1 // pred_check
      _
    $region11: #{tpu_custom_call.1} parent=1 // pred_check_branch
      %43 = sbr.rel (0) target = $region13
    $region12: #{tpu_custom_call.1} parent=1 // pred_region
      %44 = dma.done [#allocation5], 256
    $region13: #{tpu_custom_call.1} parent=1 // pred_fallthru
      _
    // Predicated region
    $region14: #{tpu_custom_call.1} parent=1 // pred_check
      _
    $region15: #{tpu_custom_call.1} parent=1 // pred_check_branch
      %46 = sbr.rel (0) target = $region17
    $region16: #{tpu_custom_call.1} parent=1 // pred_region
      %47 = dma.done [#allocation8], 256
    $region17: #{tpu_custom_call.1} parent=1 // pred_fallthru
      _
    %s48 = sadd.s32 0, 0
    %s49 = smul.u32 2, %s48
    %s50 = sadd.s32 0, 0
    %s51 = smul.u32 2, %s50
    %p52 = scmp.eq.s32.totalorder 0, 0
    // Predicated region
    $region18: #{tpu_custom_call.1} parent=1 // pred_check
      %p53 = pneg %p52
    $region19: #{tpu_custom_call.1} parent=1 // pred_check_branch
      %55 = sbr.rel (%p53) target = $region21
    $region20: #{tpu_custom_call.1} parent=1 // pred_region
      %56 = vst [vmem:[#allocation2] sm:$0xff] 0.0
      %57 = vst [vmem:[#allocation3] sm:$0xff] 0.0
    $region21: #{tpu_custom_call.1} parent=1 // pred_fallthru
      _
    %v58 = vld [vmem:[#allocation4] sm:$0xff]
    %v59 = vld [vmem:[#allocation4 + $0x8] sm:$0xff]
    %v60 = vld [vmem:[#allocation7] sm:$0xff]
    %v61 = vld [vmem:[#allocation7 + $0x8] sm:$0xff]
    %v62 = vld [vmem:[#allocation2] sm:$0xff]
    %v63 = vmul.f32 %v58, %v60
    %v64 = vmul.f32 %v59, %v61
    %v65 = vadd.f32 %v63, %v64
    %v66 = vadd.f32 %v62, %v65
    %67 = vst [vmem:[#allocation2] sm:$0xff] %v66
    %v68 = vld [vmem:[#allocation3] sm:$0xff]
    %v69 = vadd.f32 %v58, %v59
    %v70 = vadd.f32 %v60, %v61
    %v71 = vadd.f32 %v69, %v70
    %v72 = vadd.f32 %v68, %v71
    %73 = vst [vmem:[#allocation3] sm:$0xff] %v72
    // Predicated region
    $region22: #{tpu_custom_call.1} parent=1 // pred_check
      %p74 = pneg %p52
    $region23: #{tpu_custom_call.1} parent=1 // pred_check_branch
      %76 = sbr.rel (%p74) target = $region25
    $region24: #{tpu_custom_call.1} parent=1 // pred_region
      %v77 = vld [vmem:[#allocation2] sm:$0xff]
      %78 = vadd.xlane.f32.xlu0 %v77
      %v79 = vpop.xlane.xlu0 %78
      %v80 = vrot.slane %v79, 4
      %v81 = vadd.f32 %v79, %v80
      %v82 = vrot.slane %v81, 2
      %v83 = vadd.f32 %v81, %v82
      %v84 = vrot.slane %v83, 1
      %v85 = vadd.f32 %v83, %v84
      %s86 = vtos %v85
      %s87 = scalar_lea.smem [#allocation9], 0
      %88 = sst [smem:[%s87]] %s86
      %v89 = vld [vmem:[#allocation3] sm:$0xff]
      %90 = vadd.xlane.f32.xlu0 %v89
      %v91 = vpop.xlane.xlu0 %90
      %v92 = vrot.slane %v91, 4
      %v93 = vadd.f32 %v91, %v92
      %v94 = vrot.slane %v93, 2
      %v95 = vadd.f32 %v93, %v94
      %v96 = vrot.slane %v95, 1
      %v97 = vadd.f32 %v95, %v96
      %s98 = vtos %v97
      %s99 = scalar_lea.smem [#allocation9], 1
      %100 = sst [smem:[%s99]] %s98
    $region25: #{tpu_custom_call.1} parent=1 // pred_fallthru
      _
    // Predicated region
    $region26: #{tpu_custom_call.1} parent=1 // pred_check
      _
    $region27: #{tpu_custom_call.1} parent=1 // pred_check_branch
      %102 = sbr.rel (0) target = $region29
    $region28: #{tpu_custom_call.1} parent=1 // pred_region
      %s104 = ssub.s32 16, 16
      %105 = vsyncadd [#allocation6], %s104
      %108 = dma.smem_to_hbm [#allocation9], 16, %s2, [#allocation6]
    $region29: #{tpu_custom_call.1} parent=1 // pred_fallthru
      _
    // Predicated region
    $region30: #{tpu_custom_call.1} parent=1 // pred_check
      _
    $region31: #{tpu_custom_call.1} parent=1 // pred_check_branch
      %110 = sbr.rel (0) target = $region33
    $region32: #{tpu_custom_call.1} parent=1 // pred_region
      %111 = dma.done [#allocation6], 16
    $region33: #{tpu_custom_call.1} parent=1 // pred_fallthru
      _
    %112 = sfence
    %113 = vsyncpa [#allocation5], 1
    %114 = vsyncpa [#allocation8], 1
    %115 = vsyncpa [#allocation6], 1

</llo_original>
